<compile_context>
chip_gen: v7x
topology: tpu7x:2x2x1
jax: 0.10.0
libtpu: 0.0.40
codegen_flags: <defaults>
</compile_context>

<pallas_src>
import functools

import jax
import jax.numpy as jnp
from jax.experimental import pallas as pl
from jax.experimental.pallas import tpu as pltpu


_MAX_TILE_BYTES = 4 << 20      # per-buffer tile cap: 2 arrays x 2 buffers = 16 MiB VMEM
_VMEM_LIMIT_BYTES = 32 << 20   # explicit scoped-VMEM budget (safe on v5e/v6e/v7x)
_MIN_PALLAS_ELEMS = 1 << 18    # below ~1 MiB, XLA fusion beats a standalone pallas_call
_MIN_GRID_STEPS = 4            # keep >= 4 grid steps so v7x's 2 TCs both get work


def _round_up(x, m):
    return ((x + m - 1) // m) * m


def _choose_lanes(total):
    # Lane-dense slab width; None => would need padding, so let plain XLA handle it.
    for lanes in (512, 256, 128):
        if total % lanes == 0:
            return lanes
    return None


def _lambda_kernel(func, x_ref, o_ref):
    # Apply the wrapped elementwise function on the current VMEM tile.
    o_ref[...] = func(x_ref[...]).astype(o_ref.dtype)


def _pallas_elementwise_apply(func, x, out_dtype, donate_input=False):
    """Run an elementwise `func` in a Pallas kernel on a lane-dense 2D slab (no pad/slice)."""
    total = x.size
    lanes = _choose_lanes(total)
    assert lanes is not None, "caller must ensure total % 128 == 0"

    in_itemsize = jnp.dtype(x.dtype).itemsize
    out_itemsize = jnp.dtype(out_dtype).itemsize
    # Sub-32-bit dtypes pack along sublanes: 8 rows/f32, 16/bf16, 32/int8.
    sub = 8 * max(1, 4 // min(in_itemsize, out_itemsize))

    rows = total // lanes
    bytes_per_row = lanes * max(in_itemsize, out_itemsize)
    # Row tile: multiple of the packed-sublane count, capped by the VMEM budget,
    # and further capped so the grid has >= _MIN_GRID_STEPS steps (v7x megacore).
    tr_budget = max(sub, (_MAX_TILE_BYTES // bytes_per_row) // sub * sub)
    tr_target = _round_up(pl.cdiv(rows, _MIN_GRID_STEPS), sub)
    tr = min(tr_budget, tr_target)
    if tr >= rows:
        tr = rows  # single block covering the full row extent (always a legal block dim)
    grid = (pl.cdiv(rows, tr),)  # partial trailing block is masked by Pallas

    # Contiguous full-array reshape -> metadata only, no HBM traffic.
    slab = x.reshape(rows, lanes)

    kwargs = {}
    if donate_input and jnp.dtype(out_dtype) == jnp.dtype(x.dtype):
        kwargs["input_output_aliases"] = {0: 0}

    out2d = pl.pallas_call(
        functools.partial(_lambda_kernel, func),
        out_shape=jax.ShapeDtypeStruct((rows, lanes), out_dtype),
        grid=grid,
        in_specs=[pl.BlockSpec((tr, lanes), lambda i: (i, 0))],
        out_specs=pl.BlockSpec((tr, lanes), lambda i: (i, 0)),
        compiler_params=pltpu.CompilerParams(
            dimension_semantics=("parallel",),
            vmem_limit_bytes=_VMEM_LIMIT_BYTES,
        ),
        cost_estimate=pl.CostEstimate(
            flops=total,
            transcendentals=0,
            bytes_accessed=total * (in_itemsize + out_itemsize),
        ),
        **kwargs,
    )(slab)
    return out2d.reshape(x.shape)


class Lambda:
    """Pallas-backed equivalent of the PyTorch `Lambda` module: __call__(x) = func(x).

    `elementwise=True` declares that `func` is a pure per-element map (no cross-element
    mixing, no dependence on the input's shape/axes); only then may the Pallas fast
    path be used.  All other funcs -- including the flatten/view lambda used in
    compute_MI_CondEntro.py -- run as plain XLA (a reshape is metadata-only, so a copy
    kernel would only add HBM traffic).

    NOTE: `elementwise=True` is trusted; a shape-preserving but cross-element func
    (softmax, cumsum, per-row norm) would silently be re-tiled incorrectly.
    """

    def __init__(self, func, elementwise=False,
                 min_pallas_elems=_MIN_PALLAS_ELEMS, donate_input=False):
        self.func = func
        self.elementwise = elementwise
        self.min_pallas_elems = min_pallas_elems
        self.donate_input = donate_input

    def __call__(self, x):
        if not self.elementwise:
            # TODO(synk): non-elementwise funcs with real compute would need a
            # dedicated per-func kernel; here the wrapped func runs as plain XLA.
            return self.func(x)
        out_aval = jax.eval_shape(self.func, x)
        if (not isinstance(out_aval, jax.ShapeDtypeStruct)        # pytree output
                or out_aval.shape != x.shape                      # shape-changing
                or x.size < self.min_pallas_elems                 # fusion beats Pallas
                or _choose_lanes(x.size) is None):                # would need padding
            return self.func(x)
        return _pallas_elementwise_apply(self.func, x, out_aval.dtype, self.donate_input)


if __name__ == "__main__":
    key = jax.random.PRNGKey(0)
    # Layout: NCHW, matching the PyTorch module's conv-style inputs.
    x = jax.random.normal(key, (2, 4, 16, 16), dtype=jnp.float32)

    # 1) Usage as in compute_MI_CondEntro.py: Lambda(lambda x: x.view(x.size(0), -1)).
    #    Metadata-only -> no kernel, no extra HBM traffic.
    flatten = Lambda(lambda t: t.reshape(t.shape[0], -1))

    # 2) Elementwise Lambda exercising the Pallas fast path (threshold lowered so the
    #    kernel actually runs at this small test shape; default threshold is 2^18).
    scaled_relu = Lambda(lambda t: jnp.maximum(t, 0.0) * 2.0,
                         elementwise=True, min_pallas_elems=0)

    # 3) Elementwise Lambda at the default threshold -> falls back to plain XLA.
    soft_exp = Lambda(lambda t: jnp.exp(t) - 1.0, elementwise=True)

    # 4) Non-lane-aligned element count -> guarded fallback to plain XLA.
    x_odd = jax.random.normal(jax.random.PRNGKey(1), (2, 3, 5, 7), dtype=jnp.float32)
    odd_relu = Lambda(lambda t: jnp.maximum(t, 0.0), elementwise=True, min_pallas_elems=0)

    y_flat = flatten(x)
    y_act = scaled_relu(x)
    y_exp = soft_exp(x)
    y_odd = odd_relu(x_odd)
    jax.block_until_ready((y_flat, y_act, y_exp, y_odd))

    assert y_flat.shape == (2, 4 * 16 * 16) and y_flat.dtype == x.dtype
    assert y_act.shape == x.shape and y_act.dtype == x.dtype
    assert jnp.allclose(y_flat, x.reshape(x.shape[0], -1)), "flatten Lambda mismatch"
    assert jnp.allclose(y_act, jnp.maximum(x, 0.0) * 2.0), "elementwise Lambda mismatch"
    assert jnp.allclose(y_exp, jnp.exp(x) - 1.0, atol=1e-6), "fallback Lambda mismatch"
    assert jnp.allclose(y_odd, jnp.maximum(x_odd, 0.0)), "odd-shape fallback mismatch"
    print("KERNEL_OK")
</pallas_src>

<mosaic_0001>
module attributes {stable_mosaic.version = 11 : i64} {
  func.func @_lambda_kernel(%arg0: i32, %arg1: memref<4x512xf32, #tpu.memory_space<vmem>>, %arg2: memref<4x512xf32, #tpu.memory_space<vmem>>) attributes {dimension_semantics = [#tpu.dimension_semantics<parallel>], iteration_bounds = array<i64: 1>, scalar_prefetch = 0 : i64, scratch_operands = 0 : i64, tpu.core_type = #tpu.core_type<tc>, window_params = [{transform_indices = @transform_0, window_bounds = array<i64: 4, 512>}, {transform_indices = @transform_1, window_bounds = array<i64: 4, 512>}]} {
    %c0 = arith.constant 0 : index
    %c0_0 = arith.constant 0 : index
    %0 = vector.load %arg1[%c0, %c0_0] : memref<4x512xf32, #tpu.memory_space<vmem>>, vector<4x512xf32>
    %cst = arith.constant 0.000000e+00 : f32
    %1 = vector.broadcast %cst : f32 to vector<4x512xf32>
    %2 = arith.maximumf %0, %1 : vector<4x512xf32>
    %cst_1 = arith.constant 2.000000e+00 : f32
    %3 = vector.broadcast %cst_1 : f32 to vector<4x512xf32>
    %4 = arith.mulf %2, %3 : vector<4x512xf32>
    %c0_2 = arith.constant 0 : index
    %c0_3 = arith.constant 0 : index
    %5 = vector.load %arg2[%c0_2, %c0_3] : memref<4x512xf32, #tpu.memory_space<vmem>>, vector<4x512xf32>
    tpu.vector_store %arg2[%c0_2, %c0_3], %4 {strides = array<i32>} : memref<4x512xf32, #tpu.memory_space<vmem>>, vector<4x512xf32>,
    return
  }
  func.func @transform_0(%arg0: i32) -> (i32, i32) {
    %c0_i32 = arith.constant 0 : i32
    %c0_i32_0 = arith.constant 0 : i32
    return %arg0, %c0_i32 : i32, i32
  }
  func.func @transform_1(%arg0: i32) -> (i32, i32) {
    %c0_i32 = arith.constant 0 : i32
    %c0_i32_0 = arith.constant 0 : i32
    return %arg0, %c0_i32 : i32, i32
  }
}

</mosaic_0001>

<llo_original>
// kernel: tpu_custom_call.1
$region0: #{tpu_custom_call.1}
  #allocation0 [shape = 'u32[]', space=smem, size = 0x4, offset = 0x4, fixed_abs, tag = 'smem constant byte address 0x4 - core index']
  #allocation1 [shape = 'u32[144,128]{1,0:T(1,128)}', space=vmem, size = 0x12000, scoped, tag = 'internal scratch']
  %s0 = inlined_call_operand.hbm [shape: f32[4,512], index: 0, kind: input, shape index: {}]
  %s1 = inlined_call_operand.hbm [shape: f32[4,512], index: 1, kind: output, shape index: {}]
  %s2 = sld [smem:[#allocation0]]
  $region18: #{tpu_custom_call.1} parent=0
    _
  %s4 = ssub.s32 1, %s2
  %s5 = scalar_select 0, %s4, %s2
  $region1: #{tpu_custom_call.1} parent=0
    #allocation2 [shape = 'u8[8192]{0}', space=vmem, size = 0x2000, scoped, tag = 'input window, operand 0, single buffered']
    #allocation3 [shape = 's32[1]{0}', space=sflag, size = 0x4, scoped, tag = 'scoped memory for tpu_custom_call.1']
    #allocation4 [shape = 's32[1]{0}', space=sflag, size = 0x4, scoped, tag = 'scoped memory for tpu_custom_call.1']
    #allocation5 [shape = 'u8[8192]{0}', space=vmem, size = 0x2000, scoped, tag = 'output window, operand 0, single buffered']
    %6 = vsyncpa [#allocation3], 0
    %7 = vsyncpa [#allocation4], 0
    // Predicated region
    $region2: #{tpu_custom_call.1} parent=1 // pred_check
      _
    $region3: #{tpu_custom_call.1} parent=1 // pred_check_branch
      %9 = sbr.rel (0) target = $region5
    $region4: #{tpu_custom_call.1} parent=1 // pred_region
      %s11 = ssub.s32 256, 256
      %12 = vsyncadd [#allocation3], %s11
      %s14 = sshll.u32 [#allocation2], 4
      %s15 = int_to_ptr.vmem [resolvable:$true] %s14
      %17 = dma.hbm_to_vmem [thread:$0]  %s0, 256, %s15, [#allocation3]
    $region5: #{tpu_custom_call.1} parent=1 // pred_fallthru
      _
    // Predicated region
    $region6: #{tpu_custom_call.1} parent=1 // pred_check
      _
    $region7: #{tpu_custom_call.1} parent=1 // pred_check_branch
      %19 = sbr.rel (0) target = $region9
    $region8: #{tpu_custom_call.1} parent=1 // pred_region
      %20 = dma.done [#allocation3], 256
    $region9: #{tpu_custom_call.1} parent=1 // pred_fallthru
      _
    %v21 = vld [vmem:[#allocation2] sm:$0xff]
    %v22 = vld [vmem:[#allocation2 + $0x8] sm:$0xff]
    %v23 = vmax.f32 %v21, 0.0
    %v24 = vmax.f32 %v22, 0.0
    %v25 = vmul.f32 %v23, 2.0
    %v26 = vmul.f32 %v24, 2.0
    %27 = vst [vmem:[#allocation5] sm:$0xff] %v25
    %28 = vst [vmem:[#allocation5 + $0x8] sm:$0xff] %v26
    // Predicated region
    $region10: #{tpu_custom_call.1} parent=1 // pred_check
      _
    $region11: #{tpu_custom_call.1} parent=1 // pred_check_branch
      %30 = sbr.rel (0) target = $region13
    $region12: #{tpu_custom_call.1} parent=1 // pred_region
      %s32 = ssub.s32 256, 256
      %33 = vsyncadd [#allocation4], %s32
      %s35 = sshll.u32 [#allocation5], 4
      %s36 = int_to_ptr.vmem [resolvable:$true] %s35
      %38 = dma.vmem_to_hbm [thread:$0]  %s36, 256, %s1, [#allocation4]
    $region13: #{tpu_custom_call.1} parent=1 // pred_fallthru
      _
    // Predicated region
    $region14: #{tpu_custom_call.1} parent=1 // pred_check
      _
    $region15: #{tpu_custom_call.1} parent=1 // pred_check_branch
      %40 = sbr.rel (0) target = $region17
    $region16: #{tpu_custom_call.1} parent=1 // pred_region
      %41 = dma.done [#allocation4], 256
    $region17: #{tpu_custom_call.1} parent=1 // pred_fallthru
      _
    %42 = vsyncpa [#allocation3], 1
    %43 = vsyncpa [#allocation4], 1

</llo_original>
